<compile_context>
chip_gen: v7x
topology: tpu7x:2x2x1
jax: 0.10.0
libtpu: 0.0.40
codegen_flags: <defaults>
</compile_context>

<pallas_src>
import functools
import math

import jax
import jax.numpy as jnp
from jax import lax
from jax.experimental import pallas as pl
from jax.experimental.pallas import tpu as pltpu


# --------------------------------------------------------------------------
# Kernels
# --------------------------------------------------------------------------
def _pe_add_kernel(x_ref, pe_ref, o_ref, *, factor):
    """Eval-mode forward: out = x + factor * pe  (dropout is identity)."""
    # x_ref: (NB, C, TL); pe_ref: (C, TL) broadcasts over the batch sub-tile.
    o_ref[...] = (x_ref[...] + factor * pe_ref[...]).astype(o_ref.dtype)


def _srl(x, n):
    """Logical right shift for int32 (arithmetic shift + mask of kept bits)."""
    return (x >> n) & ((1 << (32 - n)) - 1)


def _pe_add_dropout_kernel(seed_ref, x_ref, pe_ref, o_ref, *, factor, rate, l_span):
    """Training-mode forward: out = dropout(x + factor * pe, p=rate)."""
    y = x_ref[...] + factor * pe_ref[...]
    nb, c, tl = y.shape

    # Globally-unique element id across the whole launch (grid = (L_tiles, N_tiles)).
    n0 = pl.program_id(1) * nb
    l0 = pl.program_id(0) * tl
    bi = lax.broadcasted_iota(jnp.int32, (nb, c, tl), 0) + n0
    ci = lax.broadcasted_iota(jnp.int32, (nb, c, tl), 1)
    li = lax.broadcasted_iota(jnp.int32, (nb, c, tl), 2) + l0
    idx = (bi * c + ci) * l_span + li

    # Counter-based hash PRNG (murmur3 finalizer on int32, wraparound == u32 bits).
    h = idx ^ seed_ref[0]
    h = (h ^ _srl(h, 16)) * jnp.int32(-2048144789)   # 0x85EBCA6B
    h = (h ^ _srl(h, 13)) * jnp.int32(-1028477387)   # 0xC2B2AE35
    h = h ^ _srl(h, 16)
    r = _srl(h, 8)                                   # uniform integer in [0, 2^24)

    keep_thresh = jnp.int32(int(round((1.0 - rate) * float(1 << 24))))
    keep = r < keep_thresh                           # P(keep) = 1 - rate
    scale = 1.0 / (1.0 - rate)                       # inverted dropout
    o_ref[...] = jnp.where(keep, y * scale, jnp.zeros_like(y)).astype(o_ref.dtype)


# --------------------------------------------------------------------------
# Wrapper
# --------------------------------------------------------------------------
_TARGET_BLOCK_BYTES = 2 * 1024 * 1024   # ~2 MiB/block amortizes the ~0.35us/step overhead
_MAX_LANE_TILE = 2048


def make_pe_buffer(d_model, max_len=10000):
    """Matches the PyTorch buffer: returns pe[0] of shape (d_model, max_len)."""
    position = jnp.arange(max_len, dtype=jnp.float32)[:, None]           # (max_len, 1)
    div_term = jnp.exp(jnp.arange(0, d_model, 2, dtype=jnp.float32)
                       * (-math.log(10000.0) / d_model))                 # (d_model//2,)
    ang = position * div_term                                            # (max_len, d_model//2)
    pe = jnp.zeros((max_len, d_model), jnp.float32)
    pe = pe.at[:, 0::2].set(jnp.sin(ang))
    pe = pe.at[:, 1::2].set(jnp.cos(ang))
    return pe.T                                                          # (d_model, max_len)


def _choose_tiles(N, C, L, itemsize):
    """Byte-budgeted (lane-tile, batch-sub-tile) selection."""
    # Lane tile: multiple of 128 (or the full extent when L <= 128).
    if L <= 128:
        tl = L
    else:
        l_pad = pl.cdiv(L, 128) * 128
        tl = 128
        while (tl * 2 <= _MAX_LANE_TILE and tl * 2 <= l_pad
               and C * tl * 2 * itemsize <= _TARGET_BLOCK_BYTES):
            tl *= 2
    # Batch sub-tile: grow until the block reaches the byte target.
    nb = 1
    while nb * 2 <= N and nb * 2 * C * tl * itemsize <= _TARGET_BLOCK_BYTES:
        nb *= 2
    # v7x megacore: ensure >= 2 grid steps so both TensorCores get work.
    if pl.cdiv(L, tl) * pl.cdiv(N, nb) < 2:
        if L > 128:
            tl = max(128, pl.cdiv(pl.cdiv(L, 128), 2) * 128)
        elif N > 1:
            nb = pl.cdiv(N, 2)
    return tl, nb


def positional_encoding(x, pe_full, *, start=0, factor=1.0,
                        dropout_p=0.1, training=False, seed=0):
    """x: (N, d_model, L) like PyTorch NCL.  pe_full: (d_model, max_len)."""
    N, C, L = x.shape
    start = int(start)  # TODO(synk): `start` must be a static Python int (static slice).
    pe = pe_full[:, start:start + L].astype(x.dtype)   # pre-cast: halves pe DMA for bf16

    itemsize = jnp.dtype(x.dtype).itemsize
    TL, NB = _choose_tiles(N, C, L, itemsize)
    n_l, n_n = pl.cdiv(L, TL), pl.cdiv(N, NB)
    # pe's index_map depends only on the outer (L-tile) axis -> it stays resident
    # while the inner batch axis iterates.
    grid = (n_l, n_n)

    x_spec = pl.BlockSpec((NB, C, TL), lambda l, n: (n, 0, l))
    pe_spec = pl.BlockSpec((C, TL), lambda l, n: (0, l))
    o_spec = pl.BlockSpec((NB, C, TL), lambda l, n: (n, 0, l))

    # VMEM budget: x / pe / out, each double-buffered, plus slack.
    bx = NB * C * TL * itemsize
    bp = C * TL * itemsize
    need = 2 * (2 * bx + bp) + (2 << 20)
    cp_kwargs = dict(dimension_semantics=("parallel", "parallel"))
    if need > (16 << 20):                       # above v5e's scoped default
        cp_kwargs["vmem_limit_bytes"] = int(min(need, 64 << 20))
    cparams = pltpu.CompilerParams(**cp_kwargs)

    out_shape = jax.ShapeDtypeStruct((N, C, L), x.dtype)

    if (not training) or dropout_p <= 0.0:
        return pl.pallas_call(
            functools.partial(_pe_add_kernel, factor=float(factor)),
            out_shape=out_shape,
            grid=grid,
            in_specs=[x_spec, pe_spec],
            out_specs=o_spec,
            compiler_params=cparams,
        )(x, pe)

    seed_arr = jnp.asarray([int(seed) & 0x7FFFFFFF], dtype=jnp.int32)
    return pl.pallas_call(
        functools.partial(_pe_add_dropout_kernel,
                          factor=float(factor), rate=float(dropout_p),
                          l_span=int(n_l * TL)),
        out_shape=out_shape,
        grid=grid,
        in_specs=[pl.BlockSpec(memory_space=pltpu.MemorySpace.SMEM),
                  x_spec, pe_spec],
        out_specs=o_spec,
        compiler_params=cparams,
    )(seed_arr, x, pe)


# --------------------------------------------------------------------------
# Self-check
# --------------------------------------------------------------------------
if __name__ == "__main__":
    N, d_model, L = 2, 32, 16
    start, factor, p = 0, 1.0, 0.1

    key = jax.random.PRNGKey(0)
    x = jax.random.normal(key, (N, d_model, L), jnp.float32)
    pe_full = make_pe_buffer(d_model, max_len=10000)

    # ---- eval mode (dropout = identity): exact numeric check vs reference ----
    out_eval = jax.block_until_ready(
        positional_encoding(x, pe_full, start=start, factor=factor,
                            dropout_p=p, training=False))
    ref = x + factor * pe_full[None, :, start:start + L]
    assert out_eval.shape == (N, d_model, L), out_eval.shape
    assert jnp.allclose(out_eval, ref, atol=1e-5, rtol=1e-5), \
        float(jnp.max(jnp.abs(out_eval - ref)))

    # ---- training mode: every element is either dropped (0) or ref/(1-p) ----
    # TODO(synk): dropout uses an in-kernel counter-hash PRNG; it matches
    # torch.nn.Dropout's distribution, not torch's exact RNG stream.
    out_train = jax.block_until_ready(
        positional_encoding(x, pe_full, start=start, factor=factor,
                            dropout_p=p, training=True, seed=1234))
    scaled = ref / (1.0 - p)
    ok = jnp.logical_or(
        out_train == 0.0,
        jnp.abs(out_train - scaled) <= 1e-4 * (1.0 + jnp.abs(scaled)))
    assert bool(jnp.all(ok))

    # ---- ragged shapes exercise cdiv tiling + batch sub-tile (eval, exact) ----
    N2, C2, L2 = 3, 16, 300
    x2 = jax.random.normal(jax.random.PRNGKey(1), (N2, C2, L2), jnp.float32)
    pe2 = make_pe_buffer(C2, max_len=1024)
    out2 = jax.block_until_ready(
        positional_encoding(x2, pe2, start=5, factor=0.5,
                            dropout_p=p, training=False))
    ref2 = x2 + 0.5 * pe2[None, :, 5:5 + L2]
    assert jnp.allclose(out2, ref2, atol=1e-5, rtol=1e-5)

    print("KERNEL_OK")
</pallas_src>

<mosaic_0001>
module attributes {stable_mosaic.version = 11 : i64} {
  func.func @_pe_add_kernel(%arg0: i32, %arg1: i32, %arg2: memref<1x32x16xf32, #tpu.memory_space<vmem>>, %arg3: memref<32x16xf32, #tpu.memory_space<vmem>>, %arg4: memref<1x32x16xf32, #tpu.memory_space<vmem>>) attributes {dimension_semantics = [#tpu.dimension_semantics<parallel>, #tpu.dimension_semantics<parallel>], iteration_bounds = array<i64: 1, 2>, scalar_prefetch = 0 : i64, scratch_operands = 0 : i64, tpu.core_type = #tpu.core_type<tc>, window_params = [{transform_indices = @transform_0, window_bounds = array<i64: 1, 32, 16>}, {transform_indices = @transform_1, window_bounds = array<i64: 32, 16>}, {transform_indices = @transform_2, window_bounds = array<i64: 1, 32, 16>}]} {
    %c0 = arith.constant 0 : index
    %c0_0 = arith.constant 0 : index
    %c0_1 = arith.constant 0 : index
    %0 = vector.load %arg2[%c0, %c0_0, %c0_1] : memref<1x32x16xf32, #tpu.memory_space<vmem>>, vector<1x32x16xf32>
    %c0_2 = arith.constant 0 : index
    %c0_3 = arith.constant 0 : index
    %1 = vector.load %arg3[%c0_2, %c0_3] : memref<32x16xf32, #tpu.memory_space<vmem>>, vector<32x16xf32>
    %cst = arith.constant 1.000000e+00 : f32
    %2 = vector.broadcast %cst : f32 to vector<32x16xf32>
    %3 = arith.mulf %2, %1 : vector<32x16xf32>
    %4 = vector.shape_cast %3 : vector<32x16xf32> to vector<1x32x16xf32>
    %5 = arith.addf %0, %4 : vector<1x32x16xf32>
    %c0_4 = arith.constant 0 : index
    %c0_5 = arith.constant 0 : index
    %c0_6 = arith.constant 0 : index
    %6 = vector.load %arg4[%c0_4, %c0_5, %c0_6] : memref<1x32x16xf32, #tpu.memory_space<vmem>>, vector<1x32x16xf32>
    tpu.vector_store %arg4[%c0_4, %c0_5, %c0_6], %5 {strides = array<i32>} : memref<1x32x16xf32, #tpu.memory_space<vmem>>, vector<1x32x16xf32>,
    return
  }
  func.func @transform_0(%arg0: i32, %arg1: i32) -> (i32, i32, i32) {
    %c0_i32 = arith.constant 0 : i32
    %c0_i32_0 = arith.constant 0 : i32
    return %arg1, %c0_i32, %arg0 : i32, i32, i32
  }
  func.func @transform_1(%arg0: i32, %arg1: i32) -> (i32, i32) {
    %c0_i32 = arith.constant 0 : i32
    %c0_i32_0 = arith.constant 0 : i32
    return %c0_i32, %arg0 : i32, i32
  }
  func.func @transform_2(%arg0: i32, %arg1: i32) -> (i32, i32, i32) {
    %c0_i32 = arith.constant 0 : i32
    %c0_i32_0 = arith.constant 0 : i32
    return %arg1, %c0_i32, %arg0 : i32, i32, i32
  }
}

</mosaic_0001>

<llo_original>
// kernel: tpu_custom_call.1
$region0: #{tpu_custom_call.1}
  #allocation0 [shape = 'u32[]', space=smem, size = 0x4, offset = 0x4, fixed_abs, tag = 'smem constant byte address 0x4 - core index']
  #allocation1 [shape = 'u32[144,128]{1,0:T(1,128)}', space=vmem, size = 0x12000, scoped, tag = 'internal scratch']
  %s0 = inlined_call_operand.vmem [shape: f32[2,32,16], index: 0, kind: input, shape index: {}]
  %s1 = inlined_call_operand.vmem [shape: f32[32,16], index: 1, kind: input, shape index: {}]
  %s2 = inlined_call_operand.vmem [shape: f32[2,32,16], index: 2, kind: output, shape index: {}]
  %s3 = sld [smem:[#allocation0]]
  $region41: #{tpu_custom_call.1} parent=0
    _
  %s5 = ssub.s32 1, %s3
  %s6 = scalar_select 0, %s5, %s3
  loop: start=0, step=1, limit=4
  $region2: #{tpu_custom_call.1} parent=0 // loop_pre_header
    _
  $region3: #{tpu_custom_call.1} parent=0 // loop_header
    %s8 = sphi 0, %s12
    %p9 = scmp.ge.s32.totalorder %s8, 4
    %s15 = sphi 0, %s27
    %s16 = sphi 0, %s23
    %s17 = sphi 0, %s15
    %s18 = sphi 0, %s16
    %s19 = sphi 0, %s17
    %s20 = sphi 0, %s18
    %s32 = sphi 0, %s34
    %s35 = sphi 0, %s32
    %s36 = sphi 0, %s35
    %s52 = sphi 0, %s36
    %s58 = sphi 0, %s60
    %s61 = sphi 0, %s58
    %s62 = sphi 0, %s61
    %s78 = sphi 0, %s62
    %s86 = sphi 0, %s88
    %s89 = sphi 0, %s86
    %s90 = sphi 0, %s89
    %s106 = sphi 0, %s90
  $region4: #{tpu_custom_call.1} parent=0 // loop_header_branch
    %11 = sbr.rel (%p9) target = $region8
  $region5: #{tpu_custom_call.1} parent=0 // loop_body
    %s13 = ssub.s32 %s8, 1
    %s14 = ssub.s32 %s8, 2
    %s21 = sadd.s32 1, %s16
    %p22 = scmp.ge.s32.totalorder %s21, 2
    %s23 = scalar_select %p22, 0, %s21
    %s24 = sadd.s32 1, %s15
    %s25 = scalar_select %p22, %s24, %s15
    %p26 = scmp.ge.s32.totalorder %s25, 1
    %s27 = scalar_select %p26, 0, %s25
    %s28 = ssub.s32 %s16, %s23
    %s29 = ssub.s32 %s15, %s27
    %s30 = sor.u32 %s28, %s29
    %p31 = scmp.eq.s32.totalorder %s30, 0
    %s33 = sadd.s32 %s32, 1
    %s34 = scalar_select %p31, %s32, %s33
    %p37 = pneg %p31
    %p38 = scmp.eq.s32.totalorder %s8, 1
    %p39 = por %p37, %p38
    %p40 = scmp.ne.s32.totalorder %s32, %s35
    %p41 = scmp.eq.s32.totalorder %s8, 0
    %p42 = por %p40, %p41
    %p43 = scmp.ne.s32.totalorder %s32, %s35
    %p44 = scmp.eq.s32.totalorder %s13, 1
    %p45 = por %p43, %p44
    %p46 = scmp.ne.s32.totalorder %s35, %s36
    %p47 = scmp.eq.s32.totalorder %s13, 0
    %p48 = por %p46, %p47
    %p49 = scmp.ne.s32.totalorder %s35, %s36
    %p50 = scmp.eq.s32.totalorder %s14, 1
    %p51 = por %p49, %p50
    %p53 = scmp.ne.s32.totalorder %s36, %s52
    %p54 = scmp.eq.s32.totalorder %s14, 0
    %p55 = por %p53, %p54
    %s56 = ssub.s32 %s15, %s27
    %p57 = scmp.eq.s32.totalorder %s56, 0
    %s59 = sadd.s32 %s58, 1
    %s60 = scalar_select %p57, %s58, %s59
    %p63 = pneg %p57
    %p64 = scmp.eq.s32.totalorder %s8, 1
    %p65 = por %p63, %p64
    %p66 = scmp.ne.s32.totalorder %s58, %s61
    %p67 = scmp.eq.s32.totalorder %s8, 0
    %p68 = por %p66, %p67
    %p69 = scmp.ne.s32.totalorder %s58, %s61
    %p70 = scmp.eq.s32.totalorder %s13, 1
    %p71 = por %p69, %p70
    %p72 = scmp.ne.s32.totalorder %s61, %s62
    %p73 = scmp.eq.s32.totalorder %s13, 0
    %p74 = por %p72, %p73
    %p75 = scmp.ne.s32.totalorder %s61, %s62
    %p76 = scmp.eq.s32.totalorder %s14, 1
    %p77 = por %p75, %p76
    %p79 = scmp.ne.s32.totalorder %s62, %s78
    %p80 = scmp.eq.s32.totalorder %s14, 0
    %p81 = por %p79, %p80
    %s82 = ssub.s32 %s16, %s23
    %s83 = ssub.s32 %s15, %s27
    %s84 = sor.u32 %s82, %s83
    %p85 = scmp.eq.s32.totalorder %s84, 0
    %s87 = sadd.s32 %s86, 1
    %s88 = scalar_select %p85, %s86, %s87
    %p91 = pneg %p85
    %p92 = scmp.eq.s32.totalorder %s8, 1
    %p93 = por %p91, %p92
    %p94 = scmp.ne.s32.totalorder %s86, %s89
    %p95 = scmp.eq.s32.totalorder %s8, 0
    %p96 = por %p94, %p95
    %p97 = scmp.ne.s32.totalorder %s86, %s89
    %p98 = scmp.eq.s32.totalorder %s13, 1
    %p99 = por %p97, %p98
    %p100 = scmp.ne.s32.totalorder %s89, %s90
    %p101 = scmp.eq.s32.totalorder %s13, 0
    %p102 = por %p100, %p101
    %p103 = scmp.ne.s32.totalorder %s89, %s90
    %p104 = scmp.eq.s32.totalorder %s14, 1
    %p105 = por %p103, %p104
    %p107 = scmp.ne.s32.totalorder %s90, %s106
    %p108 = scmp.eq.s32.totalorder %s14, 0
    %p109 = por %p107, %p108
    %p110 = scmp.le.s32.totalorder 1, %s8
    %p111 = scmp.lt.s32.totalorder %s8, 3
    %p112 = pnand %p110, %p111
    %p113 = pneg %p112
    // Predicated region
    $region9: #{tpu_custom_call.1} parent=5 // pred_check
      _
    $region10: #{tpu_custom_call.1} parent=5 // pred_check_branch
      %115 = sbr.rel (%p112) target = $region12
    $region11: #{tpu_custom_call.1} parent=5 // pred_region
      %s116 = ssub.s32 %s8, 1
      // Predicated region
      $region13: #{tpu_custom_call.1} parent=11 // pred_check
        %p117 = pneg %p74
      $region14: #{tpu_custom_call.1} parent=11 // pred_check_branch
        %119 = sbr.rel (%p117) target = $region16
      $region15: #{tpu_custom_call.1} parent=11 // pred_region
        %p120 = scmp.lt.s32.totalorder %s17, 0
        %s121 = scalar_select %p120, %s17, 0
        %s122 = smul.addr %s121, 8
        %s123 = scalar_lea.vmem %s1, %s122
      $region16: #{tpu_custom_call.1} parent=11 // pred_fallthru
        _
    $region12: #{tpu_custom_call.1} parent=5 // pred_fallthru
      _
    %p124 = scmp.lt.s32.totalorder %s8, 2
    // Predicated region
    $region17: #{tpu_custom_call.1} parent=5 // pred_check
      %p125 = pneg %p124
    $region18: #{tpu_custom_call.1} parent=5 // pred_check_branch
      %127 = sbr.rel (%p125) target = $region20
    $region19: #{tpu_custom_call.1} parent=5 // pred_region
      // Predicated region
      $region21: #{tpu_custom_call.1} parent=19 // pred_check
        %p128 = pneg %p42
      $region22: #{tpu_custom_call.1} parent=19 // pred_check_branch
        %130 = sbr.rel (%p128) target = $region24
      $region23: #{tpu_custom_call.1} parent=19 // pred_region
        %p131 = scmp.lt.s32.totalorder %s16, 1
        %s132 = scalar_select %p131, %s16, 1
        %p133 = scmp.lt.s32.totalorder %s15, 0
        %s134 = scalar_select %p133, %s15, 0
        %s135 = smul.addr %s132, 4
        %s136 = sadd.s32 %s134, %s135
        %s137 = smul.addr %s136, 8
        %s138 = scalar_lea.vmem %s0, %s137
      $region24: #{tpu_custom_call.1} parent=19 // pred_fallthru
        _
    $region20: #{tpu_custom_call.1} parent=5 // pred_fallthru
      _
    %p139 = scmp.le.s32.totalorder 1, %s8
    %p140 = scmp.lt.s32.totalorder %s8, 3
    %p141 = pnand %p139, %p140
    %p142 = pneg %p141
    // Predicated region
    $region25: #{tpu_custom_call.1} parent=5 // pred_check
      _
    $region26: #{tpu_custom_call.1} parent=5 // pred_check_branch
      %144 = sbr.rel (%p141) target = $region28
    $region27: #{tpu_custom_call.1} parent=5 // pred_region
      %s145 = ssub.s32 %s8, 1
      %p146 = scmp.lt.s32.totalorder %s18, 1
      %s147 = scalar_select %p146, %s18, 1
      %p148 = scmp.lt.s32.totalorder %s17, 0
      %s149 = scalar_select %p148, %s17, 0
      %s150 = smul.addr %s147, 4
      %s151 = sadd.s32 %s149, %s150
      %s152 = smul.addr %s151, 8
      %s153 = scalar_lea.vmem %s0, %s152
      %p154 = pneg %p48
      %p155 = pneg %p45
      %p156 = scmp.lt.s32.totalorder %s17, 0
      %s157 = scalar_select %p156, %s17, 0
      %s158 = smul.addr %s157, 8
      %s159 = scalar_lea.vmem %s1, %s158
      %p160 = pneg %p74
      %p161 = pneg %p71
      %p162 = pneg %p102
      %p163 = pneg %p99
      %p164 = scmp.lt.s32.totalorder %s18, 1
      %s165 = scalar_select %p164, %s18, 1
      %p166 = scmp.lt.s32.totalorder %s17, 0
      %s167 = scalar_select %p166, %s17, 0
      %s168 = smul.addr %s165, 4
      %s169 = sadd.s32 %s167, %s168
      %s170 = smul.addr %s169, 8
      %s171 = scalar_lea.vmem %s2, %s170
      %p172 = scmp.lt.s32.totalorder %s18, 1
      %s173 = scalar_select %p172, %s18, 1
      %p174 = scmp.lt.s32.totalorder %s17, 0
      %s175 = scalar_select %p174, %s17, 0
      %s176 = smul.addr %s173, 4
      %s177 = sadd.s32 %s175, %s176
      %s178 = smul.addr %s177, 8
      %s179 = scalar_lea.vmem %s0, %s178
      %p180 = scmp.lt.s32.totalorder %s17, 0
      %s181 = scalar_select %p180, %s17, 0
      %s182 = smul.addr %s181, 8
      %s183 = scalar_lea.vmem %s1, %s182
      %p184 = scmp.lt.s32.totalorder %s18, 1
      %s185 = scalar_select %p184, %s18, 1
      %p186 = scmp.lt.s32.totalorder %s17, 0
      %s187 = scalar_select %p186, %s17, 0
      %s188 = smul.addr %s185, 4
      %s189 = sadd.s32 %s187, %s188
      %s190 = smul.addr %s189, 8
      %s191 = scalar_lea.vmem %s2, %s190
      %v192 = vld [vmem:[%s179] sm:$0xff]
      %v193 = vld [vmem:[%s179 + $0x8] sm:$0xff]
      %v194 = vld [vmem:[%s179 + $0x10] sm:$0xff]
      %v195 = vld [vmem:[%s179 + $0x18] sm:$0xff]
      %v196 = vld [vmem:[%s183] sm:$0xff]
      %v197 = vld [vmem:[%s183 + $0x8] sm:$0xff]
      %v198 = vld [vmem:[%s183 + $0x10] sm:$0xff]
      %v199 = vld [vmem:[%s183 + $0x18] sm:$0xff]
      %v200 = vadd.f32 %v192, %v196
      %v201 = vadd.f32 %v193, %v197
      %v202 = vadd.f32 %v194, %v198
      %v203 = vadd.f32 %v195, %v199
      %vm204 = vcmask 130048
      %205 = vst.msk [vmem:[%s191] sm:$0xff] %vm204, %v200
      %206 = vst.msk [vmem:[%s191 + $0x8] sm:$0xff] %vm204, %v201
      %207 = vst.msk [vmem:[%s191 + $0x10] sm:$0xff] %vm204, %v202
      %208 = vst.msk [vmem:[%s191 + $0x18] sm:$0xff] %vm204, %v203
      %p209 = scmp.lt.s32.totalorder %s18, 1
      %s210 = scalar_select %p209, %s18, 1
      %p211 = scmp.lt.s32.totalorder %s17, 0
      %s212 = scalar_select %p211, %s17, 0
      %s213 = smul.addr %s210, 4
      %s214 = sadd.s32 %s212, %s213
      %s215 = smul.addr %s214, 8
      %s216 = scalar_lea.vmem %s2, %s215
      // Predicated region
      $region29: #{tpu_custom_call.1} parent=27 // pred_check
        %p217 = pneg %p99
      $region30: #{tpu_custom_call.1} parent=27 // pred_check_branch
        %219 = sbr.rel (%p217) target = $region32
      $region31: #{tpu_custom_call.1} parent=27 // pred_region
        _
      $region32: #{tpu_custom_call.1} parent=27 // pred_fallthru
        _
    $region28: #{tpu_custom_call.1} parent=5 // pred_fallthru
      _
    %p220 = scmp.le.s32.totalorder 2, %s8
    // Predicated region
    $region33: #{tpu_custom_call.1} parent=5 // pred_check
      %p221 = pneg %p220
    $region34: #{tpu_custom_call.1} parent=5 // pred_check_branch
      %223 = sbr.rel (%p221) target = $region36
    $region35: #{tpu_custom_call.1} parent=5 // pred_region
      %s224 = ssub.s32 %s8, 2
      // Predicated region
      $region37: #{tpu_custom_call.1} parent=35 // pred_check
        %p225 = pneg %p105
      $region38: #{tpu_custom_call.1} parent=35 // pred_check_branch
        %227 = sbr.rel (%p225) target = $region40
      $region39: #{tpu_custom_call.1} parent=35 // pred_region
        %p228 = scmp.lt.s32.totalorder %s20, 1
        %s229 = scalar_select %p228, %s20, 1
        %p230 = scmp.lt.s32.totalorder %s19, 0
        %s231 = scalar_select %p230, %s19, 0
        %s232 = smul.addr %s229, 4
        %s233 = sadd.s32 %s231, %s232
        %s234 = smul.addr %s233, 8
        %s235 = scalar_lea.vmem %s2, %s234
      $region40: #{tpu_custom_call.1} parent=35 // pred_fallthru
        _
    $region36: #{tpu_custom_call.1} parent=5 // pred_fallthru
      _
  $region6: #{tpu_custom_call.1} parent=0 // loop_footer
    %s12 = sadd.s32 1, %s8
  $region7: #{tpu_custom_call.1} parent=0 // loop_footer_branch
    %7 = sbr.rel target = $region3
  $region8: #{tpu_custom_call.1} parent=0 // loop_exit
    _

</llo_original>
